<compile_context>
chip_gen: v7x
topology: tpu7x:2x2x1
jax: 0.10.0
libtpu: 0.0.40
codegen_flags: <defaults>
</compile_context>

<pallas_src>
import functools

import jax
import jax.numpy as jnp
from jax import lax
from jax.experimental import pallas as pl
from jax.experimental.pallas import tpu as pltpu

HIDDEN = 64          # hidden width of the torch module (linear_a1 / linear_a2)
H_PAD = 128          # hidden padded to a full lane width
A_PAD = 128          # action dim padded to a full lane width
NEG = -1e30          # bias on padded action lanes -> softmax prob == 0
LEAKY_SLOPE = 0.01


def _round_up(x, m):
    return (x + m - 1) // m * m


def _to_i32(v):
    """Python-int two's-complement wrap into int32 range (for hash constants)."""
    v &= 0xFFFFFFFF
    return v - (1 << 32) if v >= (1 << 31) else v


_K1 = _to_i32(0x9E3779B9)
_K2 = _to_i32(0x85EBCA6B)
_K3 = _to_i32(0xC2B2AE35)
_K4 = _to_i32(0x7FEB352D)
_K5 = _to_i32(0x846CA68B)


def _leaky_relu(x):
    return jnp.where(x > 0, x, LEAKY_SLOPE * x)


def _uniform_noise(seed, row0, shape):
    """Counter-based uniform [0,1) noise from an integer hash.

    Only int32 elementwise ops (mul/xor/shift/and) and an i32->f32 convert are
    used, so it lowers on the Mosaic TPU backend and in interpret mode alike
    (unlike pltpu.prng_*, which broke the previous version)."""
    rows = lax.broadcasted_iota(jnp.int32, shape, 0) + row0
    cols = lax.broadcasted_iota(jnp.int32, shape, 1)
    h = rows * jnp.int32(_K1) + cols * jnp.int32(_K2) + seed * jnp.int32(_K3)
    h = (h ^ (h >> 15)) * jnp.int32(_K4)
    h = (h ^ (h >> 13)) * jnp.int32(_K5)
    h = h ^ (h >> 16)
    # low 23 bits -> f32 in [0, 1)
    return (h & jnp.int32(0x007FFFFF)).astype(jnp.float32) * jnp.float32(1.0 / (1 << 23))


def _actor_kernel(seed_ref, x_ref, w1_ref, w23_ref, b_ref, *out_refs,
                  with_logits):
    if with_logits:
        logits_ref, policy_ref = out_refs
    else:
        (policy_ref,) = out_refs

    b = b_ref[...]                                       # (3, 128) f32

    # Three small matmuls: bf16 MXU operands, f32 accumulate.
    x = x_ref[...]                                       # (bt, num_input) bf16
    h1 = jnp.dot(x, w1_ref[...], preferred_element_type=jnp.float32) + b[0:1, :]
    h1 = _leaky_relu(h1).astype(jnp.bfloat16)

    h2 = jnp.dot(h1, w23_ref[:, :H_PAD],
                 preferred_element_type=jnp.float32) + b[1:2, :]
    h2 = _leaky_relu(h2).astype(jnp.bfloat16)

    logits = jnp.dot(h2, w23_ref[:, H_PAD:],
                     preferred_element_type=jnp.float32) + b[2:3, :]

    if with_logits:
        logits_ref[...] = logits

    # Gumbel perturbation:  u ~ U(0,1),  g = -log(-log u).  Noise depends only
    # on (seed, global row, lane) -> independent of the batch tiling.
    bt = x_ref.shape[0]
    row0 = pl.program_id(0) * bt
    u = _uniform_noise(seed_ref[0], row0, logits.shape)
    u = jnp.clip(u, 1e-7, 1.0 - 1e-7)                    # keep log(-log u) finite
    z = logits - jnp.log(-jnp.log(u))

    # Numerically-stable softmax over the (padded) action lanes; padded lanes
    # carry a -1e30 bias so they get exactly zero mass.
    z = z - jnp.max(z, axis=-1, keepdims=True)
    e = jnp.exp(z)
    policy_ref[...] = e / jnp.sum(e, axis=-1, keepdims=True)


def pack_actor_params(params):
    """Pad/pack the (in, out)-layout f32 params once, outside the hot path.

    Weights are stored bf16 (native MXU rate, half the resident VMEM);
    biases stay f32."""
    w1, b1, w2, b2, w3, b3 = params
    num_input = w1.shape[0]
    action_size = w3.shape[1]
    assert w1.shape == (num_input, HIDDEN), w1.shape
    assert w2.shape == (HIDDEN, HIDDEN), w2.shape
    assert w3.shape == (HIDDEN, action_size), w3.shape
    assert action_size <= A_PAD

    w1p = jnp.zeros((num_input, H_PAD), jnp.float32).at[:, :HIDDEN].set(w1)
    w2p = jnp.zeros((H_PAD, H_PAD), jnp.float32).at[:HIDDEN, :HIDDEN].set(w2)
    w3p = jnp.zeros((H_PAD, A_PAD), jnp.float32).at[:HIDDEN, :action_size].set(w3)
    w23 = jnp.concatenate([w2p, w3p], axis=1)            # (128, 256)

    bpack = jnp.zeros((3, A_PAD), jnp.float32)
    bpack = bpack.at[0, :HIDDEN].set(b1.reshape(-1))
    bpack = bpack.at[1, :HIDDEN].set(b2.reshape(-1))
    row3 = jnp.full((A_PAD,), NEG, jnp.float32).at[:action_size].set(b3.reshape(-1))
    bpack = bpack.at[2, :].set(row3)
    return w1p.astype(jnp.bfloat16), w23.astype(jnp.bfloat16), bpack


def actor_forward(x, packed_params, action_size, seed=0, *,
                  batch_tile=1024, min_tiles=2, model_original_out=False):
    """Batched actor forward.  x: (B, num_input).

    Returns policy (B, action_size), or (logits, policy) if
    model_original_out=True — matching the torch module."""
    w1p, w23, bpack = packed_params
    B, num_input = x.shape

    # Pick n_tiles first, then the tile size: minimizes last-tile padding and,
    # for B >= 32, keeps >= min_tiles grid steps so ("parallel",) semantics can
    # spread work across both v7x TensorCores.
    n_tiles = max(1, pl.cdiv(B, batch_tile))
    if B >= 32:
        n_tiles = max(n_tiles, min_tiles)
    bt = _round_up(pl.cdiv(B, n_tiles), 16)               # 16: bf16 sublane pack
    B_pad = n_tiles * bt

    x = x.astype(jnp.float32)
    if B_pad != B:
        x = jnp.zeros((B_pad, num_input), jnp.float32).at[:B].set(x)
    x = x.astype(jnp.bfloat16)
    seed_arr = jnp.asarray([seed], jnp.int32)

    out_shape = [jax.ShapeDtypeStruct((B_pad, A_PAD), jnp.float32)]   # policy
    out_specs = [pl.BlockSpec((bt, A_PAD), lambda i, s: (i, 0))]
    if model_original_out:
        out_shape.insert(0, jax.ShapeDtypeStruct((B_pad, A_PAD), jnp.float32))
        out_specs.insert(0, pl.BlockSpec((bt, A_PAD), lambda i, s: (i, 0)))

    grid_spec = pltpu.PrefetchScalarGridSpec(
        num_scalar_prefetch=1,
        grid=(n_tiles,),
        in_specs=[
            pl.BlockSpec((bt, num_input), lambda i, s: (i, 0)),      # x tile
            pl.BlockSpec((num_input, H_PAD), lambda i, s: (0, 0)),   # w1 (resident)
            pl.BlockSpec((H_PAD, 2 * H_PAD), lambda i, s: (0, 0)),   # w2|w3 (resident)
            pl.BlockSpec((3, A_PAD), lambda i, s: (0, 0)),           # biases (resident)
        ],
        out_specs=tuple(out_specs),
    )

    outs = pl.pallas_call(
        functools.partial(_actor_kernel, with_logits=model_original_out),
        out_shape=tuple(out_shape),
        grid_spec=grid_spec,
        compiler_params=pltpu.CompilerParams(
            dimension_semantics=("parallel",)),
    )(seed_arr, x, w1p, w23, bpack)

    if model_original_out:
        logits, policy = outs
        return logits[:B, :action_size], policy[:B, :action_size]
    (policy,) = outs
    return policy[:B, :action_size]


def init_actor_params(key, num_input, action_size):
    """Deterministic Xavier-uniform-ish init (matches nn.Linear shapes)."""
    def xavier(key, fan_in, fan_out):
        limit = jnp.sqrt(6.0 / (fan_in + fan_out))
        return jax.random.uniform(key, (fan_in, fan_out), jnp.float32,
                                  minval=-limit, maxval=limit)

    k1, k2, k3, kb1, kb2, kb3 = jax.random.split(key, 6)
    w1 = xavier(k1, num_input, HIDDEN)
    w2 = xavier(k2, HIDDEN, HIDDEN)
    w3 = xavier(k3, HIDDEN, action_size)
    b1 = jax.random.uniform(kb1, (1, HIDDEN), jnp.float32, -0.1, 0.1)
    b2 = jax.random.uniform(kb2, (1, HIDDEN), jnp.float32, -0.1, 0.1)
    b3 = jax.random.uniform(kb3, (1, action_size), jnp.float32, -0.1, 0.1)
    return (w1, b1, w2, b2, w3, b3)


def _mm(a, b):
    return jnp.dot(a, b, precision=jax.lax.Precision.HIGHEST)


def _reference_logits_f32(x, params):
    """Pure-f32 reference (the torch module's deterministic part)."""
    w1, b1, w2, b2, w3, b3 = params
    h1 = _leaky_relu(_mm(x, w1) + b1)
    h2 = _leaky_relu(_mm(h1, w2) + b2)
    return _mm(h2, w3) + b3


def _reference_logits_bf16(x, params):
    """Reference that mirrors the kernel's bf16 quantization points exactly."""
    w1, b1, w2, b2, w3, b3 = params
    q = lambda a: a.astype(jnp.bfloat16).astype(jnp.float32)
    h1 = _leaky_relu(_mm(q(x), q(w1)) + b1)
    h2 = _leaky_relu(_mm(q(h1), q(w2)) + b2)
    return _mm(q(h2), q(w3)) + b3


def _check(x, params, packed, action_size, seed):
    logits, policy = actor_forward(x, packed, action_size, seed=seed,
                                   model_original_out=True)
    policy_only = actor_forward(x, packed, action_size, seed=seed)
    logits, policy, policy_only = jax.block_until_ready(
        (logits, policy, policy_only))

    # Deterministic part: tight check vs bf16-aware reference (same quantization
    # points as the kernel), loose check vs the pure-f32 torch-equivalent.
    ref_bf16 = _reference_logits_bf16(x, params)
    ref_f32 = _reference_logits_f32(x, params)
    assert logits.shape == ref_f32.shape
    assert jnp.allclose(logits, ref_bf16, rtol=1e-2, atol=1e-2), (
        float(jnp.max(jnp.abs(logits - ref_bf16))))
    assert jnp.allclose(logits, ref_f32, rtol=6e-2, atol=6e-2), (
        float(jnp.max(jnp.abs(logits - ref_f32))))

    # Stochastic softmax head: finite, non-negative, rows sum to ~1.
    for p in (policy, policy_only):
        assert p.shape == (x.shape[0], action_size)
        assert bool(jnp.all(jnp.isfinite(p)))
        assert bool(jnp.all(p >= 0))
        assert jnp.allclose(jnp.sum(p, axis=-1), 1.0, atol=1e-3)

    # Same seed -> same counter-hash noise -> identical policy on both paths.
    assert jnp.allclose(policy, policy_only, atol=1e-6)


if __name__ == "__main__":
    key = jax.random.PRNGKey(0)
    k_param, k_x1, k_x2 = jax.random.split(key, 3)

    num_input = 32
    action_size = 8

    params = init_actor_params(k_param, num_input, action_size)
    packed = pack_actor_params(params)

    # Small-batch path (single 16-row tile).
    x_small = jax.random.normal(k_x1, (2, num_input), jnp.float32)
    _check(x_small, params, packed, action_size, seed=1234)

    # Batched path: two tiles -> both TensorCores busy on v7x, small padding.
    x_big = jax.random.normal(k_x2, (300, num_input), jnp.float32)
    _check(x_big, params, packed, action_size, seed=5678)

    print("KERNEL_OK")
</pallas_src>

<mosaic_0001>
module attributes {stable_mosaic.version = 11 : i64} {
  func.func @_actor_kernel(%arg0: i32, %arg1: memref<1xi32, #tpu.memory_space<smem>>, %arg2: memref<16x32xbf16, #tpu.memory_space<vmem>>, %arg3: memref<32x128xbf16, #tpu.memory_space<vmem>>, %arg4: memref<128x256xbf16, #tpu.memory_space<vmem>>, %arg5: memref<3x128xf32, #tpu.memory_space<vmem>>, %arg6: memref<16x128xf32, #tpu.memory_space<vmem>>, %arg7: memref<16x128xf32, #tpu.memory_space<vmem>>) attributes {dimension_semantics = [#tpu.dimension_semantics<parallel>], iteration_bounds = array<i64: 1>, scalar_prefetch = 1 : i64, scratch_operands = 0 : i64, tpu.core_type = #tpu.core_type<tc>, window_params = [{transform_indices = @transform_0, window_bounds = array<i64: 16, 32>}, {pipeline_mode = #tpu.pipeline_mode<synchronous>, transform_indices = @transform_1, window_bounds = array<i64: 32, 128>}, {pipeline_mode = #tpu.pipeline_mode<synchronous>, transform_indices = @transform_2, window_bounds = array<i64: 128, 256>}, {pipeline_mode = #tpu.pipeline_mode<synchronous>, transform_indices = @transform_3, window_bounds = array<i64: 3, 128>}, {transform_indices = @transform_4, window_bounds = array<i64: 16, 128>}, {transform_indices = @transform_5, window_bounds = array<i64: 16, 128>}]} {
    %c0 = arith.constant 0 : index
    %c0_0 = arith.constant 0 : index
    %0 = vector.load %arg5[%c0, %c0_0] : memref<3x128xf32, #tpu.memory_space<vmem>>, vector<3x128xf32>
    %c0_1 = arith.constant 0 : index
    %c0_2 = arith.constant 0 : index
    %1 = vector.load %arg2[%c0_1, %c0_2] : memref<16x32xbf16, #tpu.memory_space<vmem>>, vector<16x32xbf16>
    %c0_3 = arith.constant 0 : index
    %c0_4 = arith.constant 0 : index
    %2 = vector.load %arg3[%c0_3, %c0_4] : memref<32x128xbf16, #tpu.memory_space<vmem>>, vector<32x128xbf16>
    %cst = arith.constant dense<0.000000e+00> : vector<16x128xf32>
    %3 = tpu.matmul %1, %2, %cst {dimension_numbers = #tpu.dot_dimension_numbers<[1], [0], [0], [1], [0, 0, 1, 1], [], []>} : vector<16x32xbf16>, vector<32x128xbf16>, vector<16x128xf32> -> vector<16x128xf32>
    %4 = vector.extract_strided_slice %0 {offsets = [0, 0], sizes = [1, 128], strides = [1, 1]} : vector<3x128xf32> to vector<1x128xf32>
    %5 = vector.broadcast %4 : vector<1x128xf32> to vector<16x128xf32>
    %6 = arith.addf %3, %5 : vector<16x128xf32>
    %cst_5 = arith.constant 0.000000e+00 : f32
    %7 = vector.broadcast %cst_5 : f32 to vector<16x128xf32>
    %8 = arith.cmpf ogt, %6, %7 : vector<16x128xf32>
    %cst_6 = arith.constant 0.00999999977 : f32
    %9 = vector.broadcast %cst_6 : f32 to vector<16x128xf32>
    %10 = arith.mulf %9, %6 : vector<16x128xf32>
    %11 = arith.select %8, %6, %10 : vector<16x128xi1>, vector<16x128xf32>
    %12 = arith.truncf %11 : vector<16x128xf32> to vector<16x128xbf16>
    %c0_7 = arith.constant 0 : index
    %c0_8 = arith.constant 0 : index
    %13 = vector.load %arg4[%c0_7, %c0_8] : memref<128x256xbf16, #tpu.memory_space<vmem>>, vector<128x128xbf16>
    %cst_9 = arith.constant dense<0.000000e+00> : vector<16x128xf32>
    %14 = tpu.matmul %12, %13, %cst_9 {dimension_numbers = #tpu.dot_dimension_numbers<[1], [0], [0], [1], [0, 0, 1, 1], [], []>} : vector<16x128xbf16>, vector<128x128xbf16>, vector<16x128xf32> -> vector<16x128xf32>
    %15 = vector.extract_strided_slice %0 {offsets = [1, 0], sizes = [1, 128], strides = [1, 1]} : vector<3x128xf32> to vector<1x128xf32>
    %16 = vector.broadcast %15 : vector<1x128xf32> to vector<16x128xf32>
    %17 = arith.addf %14, %16 : vector<16x128xf32>
    %cst_10 = arith.constant 0.000000e+00 : f32
    %18 = vector.broadcast %cst_10 : f32 to vector<16x128xf32>
    %19 = arith.cmpf ogt, %17, %18 : vector<16x128xf32>
    %cst_11 = arith.constant 0.00999999977 : f32
    %20 = vector.broadcast %cst_11 : f32 to vector<16x128xf32>
    %21 = arith.mulf %20, %17 : vector<16x128xf32>
    %22 = arith.select %19, %17, %21 : vector<16x128xi1>, vector<16x128xf32>
    %23 = arith.truncf %22 : vector<16x128xf32> to vector<16x128xbf16>
    %c0_12 = arith.constant 0 : index
    %c128 = arith.constant 128 : index
    %24 = vector.load %arg4[%c0_12, %c128] : memref<128x256xbf16, #tpu.memory_space<vmem>>, vector<128x128xbf16>
    %cst_13 = arith.constant dense<0.000000e+00> : vector<16x128xf32>
    %25 = tpu.matmul %23, %24, %cst_13 {dimension_numbers = #tpu.dot_dimension_numbers<[1], [0], [0], [1], [0, 0, 1, 1], [], []>} : vector<16x128xbf16>, vector<128x128xbf16>, vector<16x128xf32> -> vector<16x128xf32>
    %26 = vector.extract_strided_slice %0 {offsets = [2, 0], sizes = [1, 128], strides = [1, 1]} : vector<3x128xf32> to vector<1x128xf32>
    %27 = vector.broadcast %26 : vector<1x128xf32> to vector<16x128xf32>
    %28 = arith.addf %25, %27 : vector<16x128xf32>
    %c0_14 = arith.constant 0 : index
    %c0_15 = arith.constant 0 : index
    %29 = vector.load %arg6[%c0_14, %c0_15] : memref<16x128xf32, #tpu.memory_space<vmem>>, vector<16x128xf32>
    tpu.vector_store %arg6[%c0_14, %c0_15], %28 {strides = array<i32>} : memref<16x128xf32, #tpu.memory_space<vmem>>, vector<16x128xf32>,
    %c16_i32 = arith.constant 16 : i32
    %30 = arith.muli %arg0, %c16_i32 : i32
    %c0_16 = arith.constant 0 : index
    %31 = memref.load %arg1[%c0_16] : memref<1xi32, #tpu.memory_space<smem>>
    %32 = tpu.iota {dimensions = array<i32: 0>} : vector<16x128xi32>
    %33 = vector.broadcast %30 : i32 to vector<16x128xi32>
    %34 = arith.addi %32, %33 : vector<16x128xi32>
    %35 = tpu.iota {dimensions = array<i32: 1>} : vector<16x128xi32>
    %c-1640531527_i32 = arith.constant -1640531527 : i32
    %36 = vector.broadcast %c-1640531527_i32 : i32 to vector<16x128xi32>
    %37 = arith.muli %34, %36 : vector<16x128xi32>
    %c-2048144789_i32 = arith.constant -2048144789 : i32
    %38 = vector.broadcast %c-2048144789_i32 : i32 to vector<16x128xi32>
    %39 = arith.muli %35, %38 : vector<16x128xi32>
    %40 = arith.addi %37, %39 : vector<16x128xi32>
    %c-1028477387_i32 = arith.constant -1028477387 : i32
    %41 = arith.muli %31, %c-1028477387_i32 : i32
    %42 = vector.broadcast %41 : i32 to vector<16x128xi32>
    %43 = arith.addi %40, %42 : vector<16x128xi32>
    %c15_i32 = arith.constant 15 : i32
    %44 = vector.broadcast %c15_i32 : i32 to vector<16x128xi32>
    %45 = arith.shrsi %43, %44 : vector<16x128xi32>
    %46 = arith.xori %43, %45 : vector<16x128xi32>
    %c2146121005_i32 = arith.constant 2146121005 : i32
    %47 = vector.broadcast %c2146121005_i32 : i32 to vector<16x128xi32>
    %48 = arith.muli %46, %47 : vector<16x128xi32>
    %c13_i32 = arith.constant 13 : i32
    %49 = vector.broadcast %c13_i32 : i32 to vector<16x128xi32>
    %50 = arith.shrsi %48, %49 : vector<16x128xi32>
    %51 = arith.xori %48, %50 : vector<16x128xi32>
    %c-2073254261_i32 = arith.constant -2073254261 : i32
    %52 = vector.broadcast %c-2073254261_i32 : i32 to vector<16x128xi32>
    %53 = arith.muli %51, %52 : vector<16x128xi32>
    %c16_i32_17 = arith.constant 16 : i32
    %54 = vector.broadcast %c16_i32_17 : i32 to vector<16x128xi32>
    %55 = arith.shrsi %53, %54 : vector<16x128xi32>
    %56 = arith.xori %53, %55 : vector<16x128xi32>
    %c8388607_i32 = arith.constant 8388607 : i32
    %57 = vector.broadcast %c8388607_i32 : i32 to vector<16x128xi32>
    %58 = arith.andi %56, %57 : vector<16x128xi32>
    %59 = arith.sitofp %58 : vector<16x128xi32> to vector<16x128xf32>
    %cst_18 = arith.constant 1.1920929E-7 : f32
    %60 = vector.broadcast %cst_18 : f32 to vector<16x128xf32>
    %61 = arith.mulf %59, %60 : vector<16x128xf32>
    %cst_19 = arith.constant 1.000000e-07 : f32
    %cst_20 = arith.constant 0.99999988 : f32
    %62 = vector.broadcast %cst_19 : f32 to vector<16x128xf32>
    %63 = arith.maximumf %62, %61 : vector<16x128xf32>
    %64 = vector.broadcast %cst_20 : f32 to vector<16x128xf32>
    %65 = arith.minimumf %64, %63 : vector<16x128xf32>
    %66 = math.log %65 : vector<16x128xf32>
    %cst_21 = arith.constant 0.000000e+00 : f32
    %67 = vector.broadcast %cst_21 : f32 to vector<16x128xf32>
    %68 = arith.subf %67, %66 : vector<16x128xf32>
    %69 = math.log %68 : vector<16x128xf32>
    %70 = arith.subf %28, %69 : vector<16x128xf32>
    %cst_22 = arith.constant dense<0xFF800000> : vector<16xf32>
    %71 = vector.multi_reduction <maximumf>, %70, %cst_22 [1] : vector<16x128xf32> to vector<16xf32>
    %72 = vector.shape_cast %71 : vector<16xf32> to vector<16x1xf32>
    %73 = vector.broadcast %72 : vector<16x1xf32> to vector<16x128xf32>
    %74 = arith.subf %70, %73 : vector<16x128xf32>
    %75 = math.exp %74 : vector<16x128xf32>
    %cst_23 = arith.constant dense<0.000000e+00> : vector<16xf32>
    %76 = vector.multi_reduction <add>, %75, %cst_23 [1] : vector<16x128xf32> to vector<16xf32>
    %77 = vector.shape_cast %76 : vector<16xf32> to vector<16x1xf32>
    %78 = vector.broadcast %77 : vector<16x1xf32> to vector<16x128xf32>
    %79 = arith.divf %75, %78 : vector<16x128xf32>
    %c0_24 = arith.constant 0 : index
    %c0_25 = arith.constant 0 : index
    %80 = vector.load %arg7[%c0_24, %c0_25] : memref<16x128xf32, #tpu.memory_space<vmem>>, vector<16x128xf32>
    tpu.vector_store %arg7[%c0_24, %c0_25], %79 {strides = array<i32>} : memref<16x128xf32, #tpu.memory_space<vmem>>, vector<16x128xf32>,
    return
  }
  func.func @transform_0(%arg0: i32, %arg1: memref<1xi32, #tpu.memory_space<smem>>) -> (i32, i32) {
    %c0_i32 = arith.constant 0 : i32
    %c0_i32_0 = arith.constant 0 : i32
    return %arg0, %c0_i32 : i32, i32
  }
  func.func @transform_1(%arg0: i32, %arg1: memref<1xi32, #tpu.memory_space<smem>>) -> (i32, i32) {
    %c0_i32 = arith.constant 0 : i32
    %c0_i32_0 = arith.constant 0 : i32
    %c0_i32_1 = arith.constant 0 : i32
    return %c0_i32, %c0_i32_0 : i32, i32
  }
  func.func @transform_2(%arg0: i32, %arg1: memref<1xi32, #tpu.memory_space<smem>>) -> (i32, i32) {
    %c0_i32 = arith.constant 0 : i32
    %c0_i32_0 = arith.constant 0 : i32
    %c0_i32_1 = arith.constant 0 : i32
    return %c0_i32, %c0_i32_0 : i32, i32
  }
  func.func @transform_3(%arg0: i32, %arg1: memref<1xi32, #tpu.memory_space<smem>>) -> (i32, i32) {
    %c0_i32 = arith.constant 0 : i32
    %c0_i32_0 = arith.constant 0 : i32
    %c0_i32_1 = arith.constant 0 : i32
    return %c0_i32, %c0_i32_0 : i32, i32
  }
  func.func @transform_4(%arg0: i32, %arg1: memref<1xi32, #tpu.memory_space<smem>>) -> (i32, i32) {
    %c0_i32 = arith.constant 0 : i32
    %c0_i32_0 = arith.constant 0 : i32
    return %arg0, %c0_i32 : i32, i32
  }
  func.func @transform_5(%arg0: i32, %arg1: memref<1xi32, #tpu.memory_space<smem>>) -> (i32, i32) {
    %c0_i32 = arith.constant 0 : i32
    %c0_i32_0 = arith.constant 0 : i32
    return %arg0, %c0_i32 : i32, i32
  }
}

</mosaic_0001>

<llo_original>
// kernel: tpu_custom_call.1
$region0: #{tpu_custom_call.1}
  #allocation0 [shape = 'u32[]', space=smem, size = 0x4, offset = 0x4, fixed_abs, tag = 'smem constant byte address 0x4 - core index']
  #allocation1 [shape = 'u32[144,128]{1,0:T(1,128)}', space=vmem, size = 0x12000, scoped, tag = 'internal scratch']
  #allocation2 [shape = 's32[1]{0}', space=sflag, size = 0x4, scoped, tag = 'scoped memory for tpu_custom_call.1']
  #allocation3 [shape = 's32[1]{0:T(128)S(6)}', space=smem, size = 0x200, scoped, tag = 'prefetched SMEM operand 0']
  %s0 = inlined_call_operand.<no memory space> [shape: s32[1], index: 0, kind: input, shape index: {}]
  %s1 = inlined_call_operand.hbm [shape: bf16[16,32], index: 1, kind: input, shape index: {}]
  %s2 = inlined_call_operand.hbm [shape: bf16[32,128], index: 2, kind: input, shape index: {}]
  %s3 = inlined_call_operand.hbm [shape: bf16[128,256], index: 3, kind: input, shape index: {}]
  %s4 = inlined_call_operand.vmem [shape: f32[3,128], index: 4, kind: input, shape index: {}]
  %s5 = inlined_call_operand.hbm [shape: f32[16,128], index: 5, kind: output, shape index: {0}]
  %s6 = inlined_call_operand.hbm [shape: f32[16,128], index: 6, kind: output, shape index: {1}]
  %7 = xla_tuple %s5, %s6
  %s8 = sld [smem:[#allocation0]]
  $region46: #{tpu_custom_call.1} parent=0
    _
  %s10 = ssub.s32 1, %s8
  %s11 = scalar_select 0, %s10, %s8
  %12 = sst [smem:[#allocation3]] %s0
  $region1: #{tpu_custom_call.1} parent=0
    #allocation4 [shape = 'u8[4096]{0}', space=vmem, size = 0x1000, scoped, tag = 'input window, operand 1, single buffered']
    #allocation5 [shape = 's32[1]{0}', space=sflag, size = 0x4, scoped, tag = 'scoped memory for tpu_custom_call.1']
    #allocation6 [shape = 's32[1]{0}', space=sflag, size = 0x4, scoped, tag = 'scoped memory for tpu_custom_call.1']
    #allocation7 [shape = 'u8[8192]{0}', space=vmem, size = 0x2000, scoped, tag = 'input window, operand 2, single buffered']
    #allocation8 [shape = 's32[1]{0}', space=sflag, size = 0x4, scoped, tag = 'scoped memory for tpu_custom_call.1']
    #allocation9 [shape = 'u8[65536]{0}', space=vmem, size = 0x10000, scoped, tag = 'input window, operand 3, single buffered']
    #allocation10 [shape = 'u8[8192]{0}', space=vmem, size = 0x2000, scoped, tag = 'output window, operand 0, single buffered']
    #allocation11 [shape = 'u8[8192]{0}', space=vmem, size = 0x2000, scoped, tag = 'output window, operand 1, single buffered']
    #allocation12 [shape = 's32[1]{0}', space=sflag, size = 0x4, scoped, tag = 'scoped memory for tpu_custom_call.1']
    %13 = vsyncpa [#allocation5], 0
    %14 = vsyncpa [#allocation8], 0
    %15 = vsyncpa [#allocation6], 0
    %16 = vsyncpa [#allocation12], 0
    // Predicated region
    $region2: #{tpu_custom_call.1} parent=1 // pred_check
      _
    $region3: #{tpu_custom_call.1} parent=1 // pred_check_branch
      %18 = sbr.rel (0) target = $region5
    $region4: #{tpu_custom_call.1} parent=1 // pred_region
      %s20 = ssub.s32 128, 128
      %21 = vsyncadd [#allocation5], %s20
      %s22 = sshll.u32 [#allocation4], 4
      %s23 = int_to_ptr.vmem [resolvable:$true] %s22
      %28 = dma.hbm_to_vmem [thread:$0]  %s1, 128, %s23, [#allocation5], 64, 64, 4
    $region5: #{tpu_custom_call.1} parent=1 // pred_fallthru
      _
    // Predicated region
    $region6: #{tpu_custom_call.1} parent=1 // pred_check
      _
    $region7: #{tpu_custom_call.1} parent=1 // pred_check_branch
      %30 = sbr.rel (0) target = $region9
    $region8: #{tpu_custom_call.1} parent=1 // pred_region
      %s32 = ssub.s32 256, 256
      %33 = vsyncadd [#allocation8], %s32
      %s34 = sshll.u32 [#allocation7], 4
      %s35 = int_to_ptr.vmem [resolvable:$true] %s34
      %40 = dma.hbm_to_vmem [thread:$0]  %s2, 256, %s35, [#allocation8], 64, 64, 4
    $region9: #{tpu_custom_call.1} parent=1 // pred_fallthru
      _
    // Predicated region
    $region10: #{tpu_custom_call.1} parent=1 // pred_check
      _
    $region11: #{tpu_custom_call.1} parent=1 // pred_check_branch
      %42 = sbr.rel (0) target = $region13
    $region12: #{tpu_custom_call.1} parent=1 // pred_region
      %s44 = ssub.s32 2048, 2048
      %45 = vsyncadd [#allocation8], %s44
      %s46 = sshll.u32 [#allocation9], 4
      %s47 = int_to_ptr.vmem [resolvable:$true] %s46
      %52 = dma.hbm_to_vmem [thread:$0]  %s3, 2048, %s47, [#allocation8], 128, 128, 8
    $region13: #{tpu_custom_call.1} parent=1 // pred_fallthru
      _
    // Predicated region
    $region14: #{tpu_custom_call.1} parent=1 // pred_check
      _
    $region15: #{tpu_custom_call.1} parent=1 // pred_check_branch
      %54 = sbr.rel (0) target = $region17
    $region16: #{tpu_custom_call.1} parent=1 // pred_region
      _
    $region17: #{tpu_custom_call.1} parent=1 // pred_fallthru
      _
    // Predicated region
    $region18: #{tpu_custom_call.1} parent=1 // pred_check
      _
    $region19: #{tpu_custom_call.1} parent=1 // pred_check_branch
      %56 = sbr.rel (0) target = $region21
    $region20: #{tpu_custom_call.1} parent=1 // pred_region
      %57 = dma.done [#allocation5], 128
    $region21: #{tpu_custom_call.1} parent=1 // pred_fallthru
      _
    // Predicated region
    $region22: #{tpu_custom_call.1} parent=1 // pred_check
      _
    $region23: #{tpu_custom_call.1} parent=1 // pred_check_branch
      %59 = sbr.rel (0) target = $region25
    $region24: #{tpu_custom_call.1} parent=1 // pred_region
      %60 = dma.done [#allocation8], 256
    $region25: #{tpu_custom_call.1} parent=1 // pred_fallthru
      _
    // Predicated region
    $region26: #{tpu_custom_call.1} parent=1 // pred_check
      _
    $region27: #{tpu_custom_call.1} parent=1 // pred_check_branch
      %62 = sbr.rel (0) target = $region29
    $region28: #{tpu_custom_call.1} parent=1 // pred_region
      %63 = dma.done [#allocation8], 2048
    $region29: #{tpu_custom_call.1} parent=1 // pred_fallthru
      _
    %v65 = vld [vmem:[%s4] sm:$0x7]
    %v66 = vld [vmem:[#allocation4] sm:$0xf]
    %v67 = vld [vmem:[#allocation4 + $0x4] sm:$0xf]
    %v68 = vld [vmem:[#allocation7] sm:$0xf]
    %v69 = vld [vmem:[#allocation7 + $0x4] sm:$0xf]
    %v70 = vld [vmem:[#allocation7 + $0x8] sm:$0xf]
    %v71 = vld [vmem:[#allocation7 + $0xc] sm:$0xf]
    %v72 = vlaneseq
    %v73 = vshrl.u32 %v72, 7
    %v74 = vsub.s32 0, %v73
    %v75 = vrot.slane %v65, %v74
    %v78 = vunpack.c.l.b16 %v66
    %v79 = vunpack.c.l.b16 %v67
    %v80 = vpack.c.b16 %v79, %v78
    %v85 = vunpack.c.l.b16 %v68
    %v86 = vunpack.c.l.b16 %v69
    %v87 = vunpack.c.l.b16 %v70
    %v88 = vunpack.c.l.b16 %v71
    %v89 = vpack.c.b16 %v86, %v85
    %v90 = vpack.c.b16 %v88, %v87
    %vm93 = vcmask 261120
    %v95 = vsel %vm93, %v80, 0
    %97 = vmatprep.subr.bf16.mxu0 0
    %98 = vmatpush1.bf16.msra.mxu0 %v89
    %99 = vmatprep.subr.bf16.mxu0 0
    %100 = vmatpush1.bf16.msra.mxu0 %v90
    %101 = vmatprep.subr.bf16.mxu0 0
    %102 = vmatpush1.bf16.msra.mxu0 0
    %103 = vmatprep.subr.bf16.mxu0 0
    %104 = vmatpush1.bf16.msra.mxu0 0
    %105 = vmatprep.subr.bf16.mxu0 0
    %106 = vmatpush1.bf16.msra.mxu0 0
    %107 = vmatprep.subr.bf16.mxu0 0
    %108 = vmatpush1.bf16.msra.mxu0 0
    %109 = vmatprep.subr.bf16.mxu0 0
    %110 = vmatpush1.bf16.msra.mxu0 0
    %111 = vmatprep.subr.bf16.mxu0 0
    %112 = vmatpush1.bf16.msra.mxu0 0
    %113 = vmatprep.subr.bf16.mxu0 0
    %114 = vmatpush1.bf16.msra.mxu0 0
    %115 = vmatprep.subr.bf16.mxu0 0
    %116 = vmatpush1.bf16.msra.mxu0 0
    %117 = vmatprep.subr.bf16.mxu0 0
    %118 = vmatpush1.bf16.msra.mxu0 0
    %119 = vmatprep.subr.bf16.mxu0 0
    %120 = vmatpush1.bf16.msra.mxu0 0
    %121 = vmatprep.subr.bf16.mxu0 0
    %122 = vmatpush1.bf16.msra.mxu0 0
    %123 = vmatprep.subr.bf16.mxu0 0
    %124 = vmatpush1.bf16.msra.mxu0 0
    %125 = vmatprep.subr.bf16.mxu0 0
    %126 = vmatpush1.bf16.msra.mxu0 0
    %127 = vmatprep.subr.bf16.mxu0 0
    %128 = vmatpush1.bf16.msra.mxu0 0
    %129 = vmatprep.mubr.bf16.mxu0 0
    %130 = vmatmul.mubr.bf16.gmra.mrb[0].mxu0 %v95
    %v131 = vpop.f32.mrb[0].mxu0
    %v132 = vadd.f32 %v75, %v131
    %v133 = vpop.f32.mrb[0].mxu0
    %v134 = vpop.f32.mrb[0].mxu0
    %v135 = vadd.f32 %v75, %v134
    %v136 = vpop.f32.mrb[0].mxu0
    %137 = vdwg.mxu0
    %vm138 = vcmp.gt.f32.partialorder %v132, 0.0
    %vm139 = vcmp.gt.f32.partialorder %v135, 0.0
    %v140 = vmul.f32 %v132, 0.01
    %v141 = vmul.f32 %v135, 0.01
    %v142 = vsel %vm138, %v132, %v140
    %v143 = vsel %vm139, %v135, %v141
    %v144 = vpack.c.bf16 %v143, %v142
    %v145 = vld [vmem:[#allocation9] sm:$0xf]
    %v146 = vld [vmem:[#allocation9 + $0x8] sm:$0xf]
    %v147 = vld [vmem:[#allocation9 + $0x10] sm:$0xf]
    %v148 = vld [vmem:[#allocation9 + $0x18] sm:$0xf]
    %v149 = vld [vmem:[#allocation9 + $0x20] sm:$0xf]
    %v150 = vld [vmem:[#allocation9 + $0x28] sm:$0xf]
    %v151 = vld [vmem:[#allocation9 + $0x30] sm:$0xf]
    %v152 = vld [vmem:[#allocation9 + $0x38] sm:$0xf]
    %v153 = vld [vmem:[#allocation9 + $0x40] sm:$0xf]
    %v154 = vld [vmem:[#allocation9 + $0x48] sm:$0xf]
    %v155 = vld [vmem:[#allocation9 + $0x50] sm:$0xf]
    %v156 = vld [vmem:[#allocation9 + $0x58] sm:$0xf]
    %v157 = vld [vmem:[#allocation9 + $0x60] sm:$0xf]
    %v158 = vld [vmem:[#allocation9 + $0x68] sm:$0xf]
    %v159 = vld [vmem:[#allocation9 + $0x70] sm:$0xf]
    %v160 = vld [vmem:[#allocation9 + $0x78] sm:$0xf]
    %v161 = vlaneseq
    %v162 = vshrl.u32 %v161, 7
    %v163 = vsub.s32 1, %v162
    %v164 = vrot.slane %v65, %v163
    %v181 = vunpack.c.l.b16 %v145
    %v182 = vunpack.c.l.b16 %v146
    %v183 = vunpack.c.l.b16 %v147
    %v184 = vunpack.c.l.b16 %v148
    %v185 = vunpack.c.l.b16 %v149
    %v186 = vunpack.c.l.b16 %v150
    %v187 = vunpack.c.l.b16 %v151
    %v188 = vunpack.c.l.b16 %v152
    %v189 = vunpack.c.l.b16 %v153
    %v190 = vunpack.c.l.b16 %v154
    %v191 = vunpack.c.l.b16 %v155
    %v192 = vunpack.c.l.b16 %v156
    %v193 = vunpack.c.l.b16 %v157
    %v194 = vunpack.c.l.b16 %v158
    %v195 = vunpack.c.l.b16 %v159
    %v196 = vunpack.c.l.b16 %v160
    %v197 = vpack.c.b16 %v182, %v181
    %v198 = vpack.c.b16 %v184, %v183
    %v199 = vpack.c.b16 %v186, %v185
    %v200 = vpack.c.b16 %v188, %v187
    %v201 = vpack.c.b16 %v190, %v189
    %v202 = vpack.c.b16 %v192, %v191
    %v203 = vpack.c.b16 %v194, %v193
    %v204 = vpack.c.b16 %v196, %v195
    %213 = vmatprep.subr.bf16.mxu0 0
    %214 = vmatpush1.bf16.msra.mxu0 %v197
    %215 = vmatprep.subr.bf16.mxu0 0
    %216 = vmatpush1.bf16.msra.mxu0 %v198
    %217 = vmatprep.subr.bf16.mxu0 0
    %218 = vmatpush1.bf16.msra.mxu0 %v199
    %219 = vmatprep.subr.bf16.mxu0 0
    %220 = vmatpush1.bf16.msra.mxu0 %v200
    %221 = vmatprep.subr.bf16.mxu0 0
    %222 = vmatpush1.bf16.msra.mxu0 %v201
    %223 = vmatprep.subr.bf16.mxu0 0
    %224 = vmatpush1.bf16.msra.mxu0 %v202
    %225 = vmatprep.subr.bf16.mxu0 0
    %226 = vmatpush1.bf16.msra.mxu0 %v203
    %227 = vmatprep.subr.bf16.mxu0 0
    %228 = vmatpush1.bf16.msra.mxu0 %v204
    %229 = vmatprep.subr.bf16.mxu0 0
    %230 = vmatpush1.bf16.msra.mxu0 0
    %231 = vmatprep.subr.bf16.mxu0 0
    %232 = vmatpush1.bf16.msra.mxu0 0
    %233 = vmatprep.subr.bf16.mxu0 0
    %234 = vmatpush1.bf16.msra.mxu0 0
    %235 = vmatprep.subr.bf16.mxu0 0
    %236 = vmatpush1.bf16.msra.mxu0 0
    %237 = vmatprep.subr.bf16.mxu0 0
    %238 = vmatpush1.bf16.msra.mxu0 0
    %239 = vmatprep.subr.bf16.mxu0 0
    %240 = vmatpush1.bf16.msra.mxu0 0
    %241 = vmatprep.subr.bf16.mxu0 0
    %242 = vmatpush1.bf16.msra.mxu0 0
    %243 = vmatprep.subr.bf16.mxu0 0
    %244 = vmatpush1.bf16.msra.mxu0 0
    %245 = vmatprep.mubr.bf16.mxu0 0
    %246 = vmatmul.mubr.bf16.gmra.mrb[0].mxu0 %v144
    %v247 = vpop.f32.mrb[0].mxu0
    %v248 = vadd.f32 %v164, %v247
    %v249 = vpop.f32.mrb[0].mxu0
    %v250 = vpop.f32.mrb[0].mxu0
    %v251 = vadd.f32 %v164, %v250
    %v252 = vpop.f32.mrb[0].mxu0
    %253 = vdwg.mxu0
    %vm254 = vcmp.gt.f32.partialorder %v248, 0.0
    %vm255 = vcmp.gt.f32.partialorder %v251, 0.0
    %v256 = vmul.f32 %v248, 0.01
    %v257 = vmul.f32 %v251, 0.01
    %v258 = vsel %vm254, %v248, %v256
    %v259 = vsel %vm255, %v251, %v257
    %v260 = vpack.c.bf16 %v259, %v258
    %v261 = vld [vmem:[#allocation9 + $0x4] sm:$0xf]
    %v262 = vld [vmem:[#allocation9 + $0xc] sm:$0xf]
    %v263 = vld [vmem:[#allocation9 + $0x14] sm:$0xf]
    %v264 = vld [vmem:[#allocation9 + $0x1c] sm:$0xf]
    %v265 = vld [vmem:[#allocation9 + $0x24] sm:$0xf]
    %v266 = vld [vmem:[#allocation9 + $0x2c] sm:$0xf]
    %v267 = vld [vmem:[#allocation9 + $0x34] sm:$0xf]
    %v268 = vld [vmem:[#allocation9 + $0x3c] sm:$0xf]
    %v269 = vld [vmem:[#allocation9 + $0x44] sm:$0xf]
    %v270 = vld [vmem:[#allocation9 + $0x4c] sm:$0xf]
    %v271 = vld [vmem:[#allocation9 + $0x54] sm:$0xf]
    %v272 = vld [vmem:[#allocation9 + $0x5c] sm:$0xf]
    %v273 = vld [vmem:[#allocation9 + $0x64] sm:$0xf]
    %v274 = vld [vmem:[#allocation9 + $0x6c] sm:$0xf]
    %v275 = vld [vmem:[#allocation9 + $0x74] sm:$0xf]
    %v276 = vld [vmem:[#allocation9 + $0x7c] sm:$0xf]
    %v277 = vlaneseq
    %v278 = vshrl.u32 %v277, 7
    %v279 = vsub.s32 2, %v278
    %v280 = vrot.slane %v65, %v279
    %v297 = vunpack.c.l.b16 %v261
    %v298 = vunpack.c.l.b16 %v262
    %v299 = vunpack.c.l.b16 %v263
    %v300 = vunpack.c.l.b16 %v264
    %v301 = vunpack.c.l.b16 %v265
    %v302 = vunpack.c.l.b16 %v266
    %v303 = vunpack.c.l.b16 %v267
    %v304 = vunpack.c.l.b16 %v268
    %v305 = vunpack.c.l.b16 %v269
    %v306 = vunpack.c.l.b16 %v270
    %v307 = vunpack.c.l.b16 %v271
    %v308 = vunpack.c.l.b16 %v272
    %v309 = vunpack.c.l.b16 %v273
    %v310 = vunpack.c.l.b16 %v274
    %v311 = vunpack.c.l.b16 %v275
    %v312 = vunpack.c.l.b16 %v276
    %v313 = vpack.c.b16 %v298, %v297
    %v314 = vpack.c.b16 %v300, %v299
    %v315 = vpack.c.b16 %v302, %v301
    %v316 = vpack.c.b16 %v304, %v303
    %v317 = vpack.c.b16 %v306, %v305
    %v318 = vpack.c.b16 %v308, %v307
    %v319 = vpack.c.b16 %v310, %v309
    %v320 = vpack.c.b16 %v312, %v311
    %329 = vmatprep.subr.bf16.mxu0 0
    %330 = vmatpush1.bf16.msra.mxu0 %v313
    %331 = vmatprep.subr.bf16.mxu0 0
    %332 = vmatpush1.bf16.msra.mxu0 %v314
    %333 = vmatprep.subr.bf16.mxu0 0
    %334 = vmatpush1.bf16.msra.mxu0 %v315
    %335 = vmatprep.subr.bf16.mxu0 0
    %336 = vmatpush1.bf16.msra.mxu0 %v316
    %337 = vmatprep.subr.bf16.mxu0 0
    %338 = vmatpush1.bf16.msra.mxu0 %v317
    %339 = vmatprep.subr.bf16.mxu0 0
    %340 = vmatpush1.bf16.msra.mxu0 %v318
    %341 = vmatprep.subr.bf16.mxu0 0
    %342 = vmatpush1.bf16.msra.mxu0 %v319
    %343 = vmatprep.subr.bf16.mxu0 0
    %344 = vmatpush1.bf16.msra.mxu0 %v320
    %345 = vmatprep.subr.bf16.mxu0 0
    %346 = vmatpush1.bf16.msra.mxu0 0
    %347 = vmatprep.subr.bf16.mxu0 0
    %348 = vmatpush1.bf16.msra.mxu0 0
    %349 = vmatprep.subr.bf16.mxu0 0
    %350 = vmatpush1.bf16.msra.mxu0 0
    %351 = vmatprep.subr.bf16.mxu0 0
    %352 = vmatpush1.bf16.msra.mxu0 0
    %353 = vmatprep.subr.bf16.mxu0 0
    %354 = vmatpush1.bf16.msra.mxu0 0
    %355 = vmatprep.subr.bf16.mxu0 0
    %356 = vmatpush1.bf16.msra.mxu0 0
    %357 = vmatprep.subr.bf16.mxu0 0
    %358 = vmatpush1.bf16.msra.mxu0 0
    %359 = vmatprep.subr.bf16.mxu0 0
    %360 = vmatpush1.bf16.msra.mxu0 0
    %361 = vmatprep.mubr.bf16.mxu0 0
    %362 = vmatmul.mubr.bf16.gmra.mrb[0].mxu0 %v260
    %v363 = vpop.f32.mrb[0].mxu0
    %v364 = vadd.f32 %v280, %v363
    %v365 = vpop.f32.mrb[0].mxu0
    %v366 = vpop.f32.mrb[0].mxu0
    %v367 = vadd.f32 %v280, %v366
    %v368 = vpop.f32.mrb[0].mxu0
    %369 = vdwg.mxu0
    %370 = vst [vmem:[#allocation10] sm:$0xff] %v364
    %371 = vst [vmem:[#allocation10 + $0x8] sm:$0xff] %v367
    %s372 = smul.u32 0, 16
    %s373 = sld [smem:[#allocation3]]
    %v374 = vlaneseq
    %v375 = vshrl.u32 %v374, 7
    %v376 = vadd.s32 %v375, 8
    %v377 = vstv %s372
    %v378 = vadd.s32 %v375, %v377
    %v379 = vadd.s32 %v376, %v377
    %v380 = vlaneseq
    %v381 = vand.u32 %v380, 127
    %v382 = vmul.u32 %v378, 2654435769
    %v383 = vmul.u32 %v379, 2654435769
    %v384 = vmul.u32 %v381, 2246822507
    %v385 = vadd.s32 %v382, %v384
    %v386 = vadd.s32 %v383, %v384
    %s387 = smul.u32 %s373, 3266489909
    %v388 = vstv %s387
    %v389 = vadd.s32 %v385, %v388
    %v390 = vadd.s32 %v386, %v388
    %v391 = vshra.s32 %v389, 15
    %v392 = vshra.s32 %v390, 15
    %v393 = vxor.u32 %v389, %v391
    %v394 = vxor.u32 %v390, %v392
    %v395 = vmul.u32 %v393, 2146121005
    %v396 = vmul.u32 %v394, 2146121005
    %v397 = vshra.s32 %v395, 13
    %v398 = vshra.s32 %v396, 13
    %v399 = vxor.u32 %v395, %v397
    %v400 = vxor.u32 %v396, %v398
    %v401 = vmul.u32 %v399, 2221713035
    %v402 = vmul.u32 %v400, 2221713035
    %v403 = vshra.s32 %v401, 16
    %v404 = vshra.s32 %v402, 16
    %v405 = vxor.u32 %v401, %v403
    %v406 = vxor.u32 %v402, %v404
    %v407 = vand.u32 %v405, 8388607
    %v408 = vand.u32 %v406, 8388607
    %v409 = vcvt.s32.f32 %v407
    %v410 = vcvt.s32.f32 %v408
    %v411 = vmul.f32 %v409, 1.1920929e-07
    %v412 = vmul.f32 %v410, 1.1920929e-07
    %v413 = vmax.f32 %v411, 1e-07
    %v414 = vmax.f32 %v412, 1e-07
    %v415 = vmin.f32 %v413, 0.9999999
    %v416 = vmin.f32 %v414, 0.9999999
    %v417 = vlog2.pop %v415
    %v418 = vmul.f32 %v417, 0.6931472
    %v419 = vlog2.pop %v416
    %v420 = vmul.f32 %v419, 0.6931472
    %v421 = vsub.f32 0.0, %v418
    %v422 = vsub.f32 0.0, %v420
    %v423 = vlog2.pop %v421
    %v424 = vmul.f32 %v423, 0.6931472
    %v425 = vlog2.pop %v422
    %v426 = vmul.f32 %v425, 0.6931472
    %v427 = vsub.f32 %v364, %v424
    %v428 = vsub.f32 %v367, %v426
    %429 = vmax.xlane.f32.xlu0 %v427
    %v430 = vpop.xlane.xlu0 %429
    %431 = vmax.xlane.f32.xlu0 %v428
    %v432 = vpop.xlane.xlu0 %431
    %v433 = vsub.f32 %v427, %v430
    %v434 = vsub.f32 %v428, %v432
    %v435 = vmul.f32 %v433, 1.442695
    %v436 = vpow.pop %v435
    %v437 = vmul.f32 %v434, 1.442695
    %v438 = vpow.pop %v437
    %439 = vadd.xlane.f32.xlu0 %v436
    %v440 = vpop.xlane.xlu0 %439
    %441 = vadd.xlane.f32.xlu0 %v438
    %v442 = vpop.xlane.xlu0 %441
    %v443 = vrcp.pop %v440
    %v444 = vmul.f32 %v436, %v443
    %v445 = vrcp.pop %v442
    %v446 = vmul.f32 %v438, %v445
    %447 = vst [vmem:[#allocation11] sm:$0xff] %v444
    %448 = vst [vmem:[#allocation11 + $0x8] sm:$0xff] %v446
    // Predicated region
    $region30: #{tpu_custom_call.1} parent=1 // pred_check
      _
    $region31: #{tpu_custom_call.1} parent=1 // pred_check_branch
      %450 = sbr.rel (0) target = $region33
    $region32: #{tpu_custom_call.1} parent=1 // pred_region
      %s452 = ssub.s32 256, 256
      %453 = vsyncadd [#allocation6], %s452
      %s454 = sshll.u32 [#allocation10], 4
      %s455 = int_to_ptr.vmem [resolvable:$true] %s454
      %460 = dma.vmem_to_hbm [thread:$0]  %s455, 256, %s5, [#allocation6], 128, 128, 8
    $region33: #{tpu_custom_call.1} parent=1 // pred_fallthru
      _
    // Predicated region
    $region34: #{tpu_custom_call.1} parent=1 // pred_check
      _
    $region35: #{tpu_custom_call.1} parent=1 // pred_check_branch
      %462 = sbr.rel (0) target = $region37
    $region36: #{tpu_custom_call.1} parent=1 // pred_region
      %s464 = ssub.s32 256, 256
      %465 = vsyncadd [#allocation12], %s464
      %s466 = sshll.u32 [#allocation11], 4
      %s467 = int_to_ptr.vmem [resolvable:$true] %s466
      %472 = dma.vmem_to_hbm [thread:$0]  %s467, 256, %s6, [#allocation12], 128, 128, 8
    $region37: #{tpu_custom_call.1} parent=1 // pred_fallthru
      _
    // Predicated region
    $region38: #{tpu_custom_call.1} parent=1 // pred_check
      _
    $region39: #{tpu_custom_call.1} parent=1 // pred_check_branch
      %474 = sbr.rel (0) target = $region41
    $region40: #{tpu_custom_call.1} parent=1 // pred_region
      %475 = dma.done [#allocation6], 256
    $region41: #{tpu_custom_call.1} parent=1 // pred_fallthru
      _
    // Predicated region
    $region42: #{tpu_custom_call.1} parent=1 // pred_check
      _
    $region43: #{tpu_custom_call.1} parent=1 // pred_check_branch
      %477 = sbr.rel (0) target = $region45
    $region44: #{tpu_custom_call.1} parent=1 // pred_region
      %478 = dma.done [#allocation12], 256
    $region45: #{tpu_custom_call.1} parent=1 // pred_fallthru
      _
    %479 = vsyncpa [#allocation5], 1
    %480 = vsyncpa [#allocation8], 1
    %481 = vsyncpa [#allocation6], 1
    %482 = vsyncpa [#allocation12], 1

</llo_original>
